<compile_context>
chip_gen: v7x
topology: tpu7x:2x2x1
jax: 0.10.0
libtpu: 0.0.40
codegen_flags: <defaults>
</compile_context>

<pallas_src>
import jax
import jax.numpy as jnp
import numpy as np
from jax.experimental import pallas as pl
from jax.experimental.pallas import tpu as pltpu


def _round_up(n, m):
    return ((n + m - 1) // m) * m


def encoder_pool_project_kernel(x_ref, m_ref, w_ref, b_ref, o_ref,
                                sum_ref, cnt_ref):
    """Masked mean-pool over L (chunked on the grid), then project to D.

    Grid: (num_L_chunks,)  -- pure reduction axis ("arbitrary").

    x_ref:   [B, Lc, H]  bf16  token representations (one L chunk)
    m_ref:   [B, Lc, 1]  f32   padding mask (1.0 real token, 0.0 pad)
    w_ref:   [H, D]      bf16  frozen encoder projection (constant block)
    b_ref:   [1, D]      f32   frozen encoder bias (constant block)
    o_ref:   [B, D]      f32   pooled sequence embedding (constant block)
    sum_ref: [B, H]      f32   VMEM scratch -- masked-sum accumulator
    cnt_ref: [B, 1]      f32   VMEM scratch -- real-token count accumulator
    """
    step = pl.program_id(0)

    @pl.when(step == 0)
    def _():
        sum_ref[...] = jnp.zeros_like(sum_ref)
        cnt_ref[...] = jnp.zeros_like(cnt_ref)

    x = x_ref[...].astype(jnp.float32)          # [B, Lc, H]  f32 accumulation
    m = m_ref[...]                              # [B, Lc, 1]  lane-broadcast over H
    sum_ref[...] += jnp.sum(x * m, axis=1)      # [B, H]
    cnt_ref[...] += jnp.sum(m, axis=1)          # [B, 1]

    @pl.when(step == pl.num_programs(0) - 1)
    def _():
        denom = jnp.maximum(cnt_ref[...], 1.0)                      # guard all-pad rows
        pooled = sum_ref[...] * pl.reciprocal(denom, approx=True)   # EUP slot
        acc = jnp.dot(pooled.astype(jnp.bfloat16), w_ref[...],
                      preferred_element_type=jnp.float32)           # [B, D] MXU
        o_ref[...] = (acc + b_ref[...]).astype(o_ref.dtype)


def esm_pool_project(x, mask, w, b, *, l_chunk=None,
                     chunk_vmem_budget=4 * 1024 * 1024):
    """One frozen ESM encoder hot path: masked mean-pool over L, project to D.

    x:    [B, L, H] float   per-token representations (cast to bf16 for DMA)
    mask: [B, L]    float   1.0 = real token, 0.0 = padding
    w:    [H, D]            frozen projection
    b:    [1, D] or [D]     frozen bias
    returns [B, D] f32 pooled sequence embedding.
    """
    B, L, H = x.shape
    Hw, D = w.shape
    assert Hw == H
    assert D % 128 == 0, "embedding size must be lane-aligned (multiple of 128)"

    # Pick an L chunk: multiple of 8, bounded so one bf16 x chunk (which is
    # double-buffered by the BlockSpec pipeline) stays within a few MiB of
    # VMEM -> portable across v7x (64 MiB) / v6e / v5e.
    if l_chunk is None:
        max_lc = max(8, (chunk_vmem_budget // max(B * H * 2, 1)) // 8 * 8)
        l_chunk = min(_round_up(L, 8), max_lc)
    Lp = _round_up(L, l_chunk)
    n_chunks = Lp // l_chunk

    # Pad only along L (padded positions get mask 0 -> exact). NO batch padding.
    x_bf16 = jnp.pad(x, ((0, 0), (0, Lp - L), (0, 0))).astype(jnp.bfloat16)
    m3 = jnp.pad(mask.astype(jnp.float32), ((0, 0), (0, Lp - L)))[:, :, None]
    w_bf16 = w.astype(jnp.bfloat16)
    b2 = jnp.asarray(b, dtype=jnp.float32).reshape(1, D)

    cost = pl.CostEstimate(
        flops=2 * B * Lp * H + 2 * B * H * D,
        transcendentals=B,
        bytes_accessed=(x_bf16.size * 2 + m3.size * 4 + w_bf16.size * 2
                        + b2.size * 4 + B * D * 4),
    )

    return pl.pallas_call(
        encoder_pool_project_kernel,
        out_shape=jax.ShapeDtypeStruct((B, D), jnp.float32),
        grid=(n_chunks,),
        in_specs=[
            pl.BlockSpec((B, l_chunk, H), lambda l: (0, l, 0)),   # x chunk
            pl.BlockSpec((B, l_chunk, 1), lambda l: (0, l, 0)),   # mask chunk
            pl.BlockSpec((H, D), lambda l: (0, 0)),               # W (constant)
            pl.BlockSpec((1, D), lambda l: (0, 0)),               # bias (constant)
        ],
        out_specs=pl.BlockSpec((B, D), lambda l: (0, 0)),          # lane-dense out
        scratch_shapes=[pltpu.VMEM((B, H), jnp.float32),
                        pltpu.VMEM((B, 1), jnp.float32)],
        compiler_params=pltpu.CompilerParams(
            dimension_semantics=("arbitrary",),   # reduction over L chunks
            vmem_limit_bytes=48 * 1024 * 1024,
        ),
        cost_estimate=cost,
    )(x_bf16, m3, w_bf16, b2)


def make_encoder_params(key, hidden, emb_dim):
    """Deterministic frozen 'ESM encoder' parameters (stand-in for esm2 weights)."""
    kw, kb = jax.random.split(key)
    w = (jax.random.normal(kw, (hidden, emb_dim), dtype=jnp.float32)
         / jnp.sqrt(jnp.float32(hidden)))
    b = 0.01 * jax.random.normal(kb, (1, emb_dim), dtype=jnp.float32)
    return w, b


if __name__ == "__main__":
    # Small shapes consistent with the module:
    #   batch=2, seq_len=8 tokens, token-rep hidden=32,
    #   protein_embedding_size = proteina_embedding_size = 1280 (module default).
    B, L, H = 2, 8, 32
    PROTEIN_EMB = 1280
    PROTEINA_EMB = 1280
    VOCAB = 33  # ESM-2 alphabet size

    root = jax.random.PRNGKey(0)
    k_tok_a, k_tok_b, k_embed, k_enc_a, k_enc_b = jax.random.split(root, 5)

    # Tokenized sequences (what batch_converter would produce) + padding masks.
    tokens_protein = jax.random.randint(k_tok_a, (B, L), 0, VOCAB)
    tokens_proteina = jax.random.randint(k_tok_b, (B, L), 0, VOCAB)
    mask_p = jnp.array([[1.0] * L, [1.0] * 6 + [0.0] * 2], dtype=jnp.float32)
    mask_a = jnp.array([[1.0] * 7 + [0.0] * 1, [1.0] * L], dtype=jnp.float32)

    # Shared token-embedding table (glue: the gather stays in plain JAX).
    embed_table = 0.1 * jax.random.normal(k_embed, (VOCAB, H), dtype=jnp.float32)
    x_protein = embed_table[tokens_protein]     # [B, L, H]
    x_proteina = embed_table[tokens_proteina]   # [B, L, H]

    # Two independent frozen encoders (protein_model / proteina_model).
    w_p, b_p = make_encoder_params(k_enc_a, H, PROTEIN_EMB)
    w_a, b_a = make_encoder_params(k_enc_b, H, PROTEINA_EMB)

    # One pallas_call per frozen encoder (no host-side stacking of x).
    protein_embedding = esm_pool_project(x_protein, mask_p, w_p, b_p)
    proteina_embedding = esm_pool_project(x_proteina, mask_a, w_a, b_a)
    jax.block_until_ready((protein_embedding, proteina_embedding))

    assert protein_embedding.shape == (B, PROTEIN_EMB)
    assert proteina_embedding.shape == (B, PROTEINA_EMB)

    # Pure-JAX f32 reference (project-then-pool == pool-then-project exactly).
    # Tolerances cover bf16 x / bf16 pooled MXU inputs + approx reciprocal.
    def ref(x, m, w, b):
        pooled = (x * m[:, :, None]).sum(1) / jnp.maximum(
            m.sum(1, keepdims=True), 1.0)
        return pooled @ w + b.reshape(1, -1)

    np.testing.assert_allclose(
        np.asarray(protein_embedding), np.asarray(ref(x_protein, mask_p, w_p, b_p)),
        rtol=0.1, atol=0.02)
    np.testing.assert_allclose(
        np.asarray(proteina_embedding), np.asarray(ref(x_proteina, mask_a, w_a, b_a)),
        rtol=0.1, atol=0.02)

    print("KERNEL_OK")
</pallas_src>

<mosaic_0001>
module attributes {stable_mosaic.version = 11 : i64} {
  func.func @encoder_pool_project_kernel(%arg0: i32, %arg1: memref<2x8x32xbf16, #tpu.memory_space<vmem>>, %arg2: memref<2x8x1xf32, #tpu.memory_space<vmem>>, %arg3: memref<32x1280xbf16, #tpu.memory_space<vmem>>, %arg4: memref<1x1280xf32, #tpu.memory_space<vmem>>, %arg5: memref<2x1280xf32, #tpu.memory_space<vmem>>, %arg6: memref<2x32xf32, #tpu.memory_space<vmem>>, %arg7: memref<2x1xf32, #tpu.memory_space<vmem>>) attributes {dimension_semantics = [#tpu.dimension_semantics<arbitrary>], iteration_bounds = array<i64: 1>, scalar_prefetch = 0 : i64, scratch_operands = 2 : i64, tpu.core_type = #tpu.core_type<tc>, window_params = [{transform_indices = @transform_0, window_bounds = array<i64: 2, 8, 32>}, {transform_indices = @transform_1, window_bounds = array<i64: 2, 8, 1>}, {pipeline_mode = #tpu.pipeline_mode<synchronous>, transform_indices = @transform_2, window_bounds = array<i64: 32, 1280>}, {pipeline_mode = #tpu.pipeline_mode<synchronous>, transform_indices = @transform_3, window_bounds = array<i64: 1, 1280>}, {pipeline_mode = #tpu.pipeline_mode<synchronous>, transform_indices = @transform_4, window_bounds = array<i64: 2, 1280>}]} {
    %c0_i32 = arith.constant 0 : i32
    %0 = arith.cmpi eq, %arg0, %c0_i32 : i32
    %1 = arith.extui %0 : i1 to i32
    %c0_i32_0 = arith.constant 0 : i32
    %2 = arith.cmpi ne, %1, %c0_i32_0 : i32
    scf.if %2 {
      %cst_17 = arith.constant 0.000000e+00 : f32
      %19 = vector.broadcast %cst_17 : f32 to vector<2x32xf32>
      %c0_18 = arith.constant 0 : index
      %c0_19 = arith.constant 0 : index
      %20 = vector.load %arg6[%c0_18, %c0_19] : memref<2x32xf32, #tpu.memory_space<vmem>>, vector<2x32xf32>
      tpu.vector_store %arg6[%c0_18, %c0_19], %19 {strides = array<i32>} : memref<2x32xf32, #tpu.memory_space<vmem>>, vector<2x32xf32>,
      %cst_20 = arith.constant 0.000000e+00 : f32
      %21 = vector.broadcast %cst_20 : f32 to vector<2x1xf32>
      %c0_21 = arith.constant 0 : index
      %c0_22 = arith.constant 0 : index
      %22 = vector.load %arg7[%c0_21, %c0_22] : memref<2x1xf32, #tpu.memory_space<vmem>>, vector<2x1xf32>
      tpu.vector_store %arg7[%c0_21, %c0_22], %21 {strides = array<i32>} : memref<2x1xf32, #tpu.memory_space<vmem>>, vector<2x1xf32>,
    } else {
    }
    %c0 = arith.constant 0 : index
    %c0_1 = arith.constant 0 : index
    %c0_2 = arith.constant 0 : index
    %3 = vector.load %arg1[%c0, %c0_1, %c0_2] : memref<2x8x32xbf16, #tpu.memory_space<vmem>>, vector<2x8x32xbf16>
    %4 = arith.extf %3 : vector<2x8x32xbf16> to vector<2x8x32xf32>
    %c0_3 = arith.constant 0 : index
    %c0_4 = arith.constant 0 : index
    %c0_5 = arith.constant 0 : index
    %5 = vector.load %arg2[%c0_3, %c0_4, %c0_5] : memref<2x8x1xf32, #tpu.memory_space<vmem>>, vector<2x8x1xf32>
    %c0_6 = arith.constant 0 : index
    %c0_7 = arith.constant 0 : index
    %6 = vector.load %arg6[%c0_6, %c0_7] : memref<2x32xf32, #tpu.memory_space<vmem>>, vector<2x32xf32>
    %7 = vector.broadcast %5 : vector<2x8x1xf32> to vector<2x8x32xf32>
    %8 = arith.mulf %4, %7 : vector<2x8x32xf32>
    %cst = arith.constant dense<0.000000e+00> : vector<2x32xf32>
    %9 = vector.multi_reduction <add>, %8, %cst [1] : vector<2x8x32xf32> to vector<2x32xf32>
    %10 = arith.addf %6, %9 : vector<2x32xf32>
    %c0_8 = arith.constant 0 : index
    %c0_9 = arith.constant 0 : index
    %11 = vector.load %arg6[%c0_8, %c0_9] : memref<2x32xf32, #tpu.memory_space<vmem>>, vector<2x32xf32>
    tpu.vector_store %arg6[%c0_8, %c0_9], %10 {strides = array<i32>} : memref<2x32xf32, #tpu.memory_space<vmem>>, vector<2x32xf32>,
    %c0_10 = arith.constant 0 : index
    %c0_11 = arith.constant 0 : index
    %12 = vector.load %arg7[%c0_10, %c0_11] : memref<2x1xf32, #tpu.memory_space<vmem>>, vector<2x1xf32>
    %cst_12 = arith.constant dense<0.000000e+00> : vector<2x1xf32>
    %13 = vector.multi_reduction <add>, %5, %cst_12 [1] : vector<2x8x1xf32> to vector<2x1xf32>
    %14 = arith.addf %12, %13 : vector<2x1xf32>
    %c0_13 = arith.constant 0 : index
    %c0_14 = arith.constant 0 : index
    %15 = vector.load %arg7[%c0_13, %c0_14] : memref<2x1xf32, #tpu.memory_space<vmem>>, vector<2x1xf32>
    tpu.vector_store %arg7[%c0_13, %c0_14], %14 {strides = array<i32>} : memref<2x1xf32, #tpu.memory_space<vmem>>, vector<2x1xf32>,
    %c0_i32_15 = arith.constant 0 : i32
    %16 = arith.cmpi eq, %arg0, %c0_i32_15 : i32
    %17 = arith.extui %16 : i1 to i32
    %c0_i32_16 = arith.constant 0 : i32
    %18 = arith.cmpi ne, %17, %c0_i32_16 : i32
    scf.if %18 {
      %c0_17 = arith.constant 0 : index
      %c0_18 = arith.constant 0 : index
      %19 = vector.load %arg7[%c0_17, %c0_18] : memref<2x1xf32, #tpu.memory_space<vmem>>, vector<2x1xf32>
      %cst_19 = arith.constant 1.000000e+00 : f32
      %20 = vector.broadcast %cst_19 : f32 to vector<2x1xf32>
      %21 = arith.maximumf %19, %20 : vector<2x1xf32>
      %c0_20 = arith.constant 0 : index
      %c0_21 = arith.constant 0 : index
      %22 = vector.load %arg6[%c0_20, %c0_21] : memref<2x32xf32, #tpu.memory_space<vmem>>, vector<2x32xf32>
      %23 = tpu.reciprocal %21 {approx = true} : vector<2x1xf32> -> vector<2x1xf32>
      %24 = vector.broadcast %23 : vector<2x1xf32> to vector<2x32xf32>
      %25 = arith.mulf %22, %24 : vector<2x32xf32>
      %26 = arith.truncf %25 : vector<2x32xf32> to vector<2x32xbf16>
      %c0_22 = arith.constant 0 : index
      %c0_23 = arith.constant 0 : index
      %27 = vector.load %arg3[%c0_22, %c0_23] : memref<32x1280xbf16, #tpu.memory_space<vmem>>, vector<32x1280xbf16>
      %cst_24 = arith.constant dense<0.000000e+00> : vector<2x1280xf32>
      %28 = tpu.matmul %26, %27, %cst_24 {dimension_numbers = #tpu.dot_dimension_numbers<[1], [0], [0], [1], [0, 0, 1, 1], [], []>} : vector<2x32xbf16>, vector<32x1280xbf16>, vector<2x1280xf32> -> vector<2x1280xf32>
      %c0_25 = arith.constant 0 : index
      %c0_26 = arith.constant 0 : index
      %29 = vector.load %arg4[%c0_25, %c0_26] : memref<1x1280xf32, #tpu.memory_space<vmem>>, vector<1x1280xf32>
      %30 = vector.broadcast %29 : vector<1x1280xf32> to vector<2x1280xf32>
      %31 = arith.addf %28, %30 : vector<2x1280xf32>
      %c0_27 = arith.constant 0 : index
      %c0_28 = arith.constant 0 : index
      %32 = vector.load %arg5[%c0_27, %c0_28] : memref<2x1280xf32, #tpu.memory_space<vmem>>, vector<2x1280xf32>
      tpu.vector_store %arg5[%c0_27, %c0_28], %31 {strides = array<i32>} : memref<2x1280xf32, #tpu.memory_space<vmem>>, vector<2x1280xf32>,
    } else {
    }
    return
  }
  func.func @transform_0(%arg0: i32) -> (i32, i32, i32) {
    %c0_i32 = arith.constant 0 : i32
    %c0_i32_0 = arith.constant 0 : i32
    %c0_i32_1 = arith.constant 0 : i32
    return %c0_i32, %arg0, %c0_i32_0 : i32, i32, i32
  }
  func.func @transform_1(%arg0: i32) -> (i32, i32, i32) {
    %c0_i32 = arith.constant 0 : i32
    %c0_i32_0 = arith.constant 0 : i32
    %c0_i32_1 = arith.constant 0 : i32
    return %c0_i32, %arg0, %c0_i32_0 : i32, i32, i32
  }
  func.func @transform_2(%arg0: i32) -> (i32, i32) {
    %c0_i32 = arith.constant 0 : i32
    %c0_i32_0 = arith.constant 0 : i32
    %c0_i32_1 = arith.constant 0 : i32
    return %c0_i32, %c0_i32_0 : i32, i32
  }
  func.func @transform_3(%arg0: i32) -> (i32, i32) {
    %c0_i32 = arith.constant 0 : i32
    %c0_i32_0 = arith.constant 0 : i32
    %c0_i32_1 = arith.constant 0 : i32
    return %c0_i32, %c0_i32_0 : i32, i32
  }
  func.func @transform_4(%arg0: i32) -> (i32, i32) {
    %c0_i32 = arith.constant 0 : i32
    %c0_i32_0 = arith.constant 0 : i32
    %c0_i32_1 = arith.constant 0 : i32
    return %c0_i32, %c0_i32_0 : i32, i32
  }
}

</mosaic_0001>

<llo_original>
// kernel: tpu_custom_call.1
$region0: #{tpu_custom_call.1}
  #allocation0 [shape = 'u32[]', space=smem, size = 0x4, offset = 0x4, fixed_abs, tag = 'smem constant byte address 0x4 - core index']
  #allocation1 [shape = 'u32[144,128]{1,0:T(1,128)}', space=vmem, size = 0x12000, scoped, tag = 'internal scratch']
  #allocation2 [shape = 'f32[2,32]{1,0:T(2,128)}', space=vmem, size = 0x400, scoped, tag = 'scratch operand']
  #allocation3 [shape = 'f32[2,1]{1,0:T(2,128)}', space=vmem, size = 0x400, scoped, tag = 'scratch operand']
  %s0 = inlined_call_operand.vmem [shape: bf16[2,8,32], index: 0, kind: input, shape index: {}]
  %s1 = inlined_call_operand.vmem [shape: f32[2,8,1], index: 1, kind: input, shape index: {}]
  %s2 = inlined_call_operand.hbm [shape: bf16[32,1280], index: 2, kind: input, shape index: {}]
  %s3 = inlined_call_operand.vmem [shape: f32[1,1280], index: 3, kind: input, shape index: {}]
  %s4 = inlined_call_operand.hbm [shape: f32[2,1280], index: 4, kind: output, shape index: {}]
  %s5 = sld [smem:[#allocation0]]
  $region38: #{tpu_custom_call.1} parent=0
    _
  %s7 = ssub.s32 1, %s5
  %s8 = scalar_select 0, %s7, %s5
  $region1: #{tpu_custom_call.1} parent=0
    #allocation4 [shape = 'u8[81920]{0}', space=vmem, size = 0x14000, scoped, tag = 'input window, operand 2, single buffered']
    #allocation5 [shape = 's32[1]{0}', space=sflag, size = 0x4, scoped, tag = 'scoped memory for tpu_custom_call.1']
    #allocation6 [shape = 's32[1]{0}', space=sflag, size = 0x4, scoped, tag = 'scoped memory for tpu_custom_call.1']
    #allocation7 [shape = 'u8[10240]{0}', space=vmem, size = 0x2800, scoped, tag = 'output window, operand 0, single buffered']
    %9 = vsyncpa [#allocation5], 0
    %10 = vsyncpa [#allocation6], 0
    // Predicated region
    $region2: #{tpu_custom_call.1} parent=1 // pred_check
      _
    $region3: #{tpu_custom_call.1} parent=1 // pred_check_branch
      %12 = sbr.rel (0) target = $region5
    $region4: #{tpu_custom_call.1} parent=1 // pred_region
      _
    $region5: #{tpu_custom_call.1} parent=1 // pred_fallthru
      _
    // Predicated region
    $region6: #{tpu_custom_call.1} parent=1 // pred_check
      _
    $region7: #{tpu_custom_call.1} parent=1 // pred_check_branch
      %14 = sbr.rel (0) target = $region9
    $region8: #{tpu_custom_call.1} parent=1 // pred_region
      _
    $region9: #{tpu_custom_call.1} parent=1 // pred_fallthru
      _
    // Predicated region
    $region10: #{tpu_custom_call.1} parent=1 // pred_check
      _
    $region11: #{tpu_custom_call.1} parent=1 // pred_check_branch
      %16 = sbr.rel (0) target = $region13
    $region12: #{tpu_custom_call.1} parent=1 // pred_region
      %s18 = ssub.s32 2560, 2560
      %19 = vsyncadd [#allocation5], %s18
      %s20 = sshll.u32 [#allocation4], 4
      %s21 = int_to_ptr.vmem [resolvable:$true] %s20
      %26 = dma.hbm_to_vmem [thread:$0]  %s2, 2560, %s21, [#allocation5], 640, 640, 40
    $region13: #{tpu_custom_call.1} parent=1 // pred_fallthru
      _
    // Predicated region
    $region14: #{tpu_custom_call.1} parent=1 // pred_check
      _
    $region15: #{tpu_custom_call.1} parent=1 // pred_check_branch
      %28 = sbr.rel (0) target = $region17
    $region16: #{tpu_custom_call.1} parent=1 // pred_region
      _
    $region17: #{tpu_custom_call.1} parent=1 // pred_fallthru
      _
    // Predicated region
    $region18: #{tpu_custom_call.1} parent=1 // pred_check
      _
    $region19: #{tpu_custom_call.1} parent=1 // pred_check_branch
      %30 = sbr.rel (0) target = $region21
    $region20: #{tpu_custom_call.1} parent=1 // pred_region
      %31 = dma.done [#allocation5], 2560
    $region21: #{tpu_custom_call.1} parent=1 // pred_fallthru
      _
    %p33 = scmp.eq.s32.totalorder 0, 0
    // Predicated region
    $region22: #{tpu_custom_call.1} parent=1 // pred_check
      %p34 = pneg %p33
    $region23: #{tpu_custom_call.1} parent=1 // pred_check_branch
      %36 = sbr.rel (%p34) target = $region25
    $region24: #{tpu_custom_call.1} parent=1 // pred_region
      %vm37 = vcmask 254976
      %38 = vst.msk [vmem:[#allocation2] sm:$0x3] %vm37, 0.0
      %vm39 = vcmask 1024
      %40 = vst.msk [vmem:[#allocation3] sm:$0x3] %vm39, 0.0
    $region25: #{tpu_custom_call.1} parent=1 // pred_fallthru
      _
    %v41 = vld [vmem:[%s0] sm:$0xf]
    %v42 = vld [vmem:[%s0 + $0x4] sm:$0xf]
    %v43 = vunpack.c.l.bf16 %v41
    %v44 = vunpack.c.l.bf16 %v42
    %v45 = vld [vmem:[%s1] sm:$0xff]
    %v46 = vld [vmem:[%s1 + $0x8] sm:$0xff]
    %v47 = vld [vmem:[#allocation2] sm:$0x3]
    %49 = vset.pattern.permute.xlu0 0
    %50 = vperm.xlu0 %49, %v45
    %v51 = vpop.permute.xlu0 %50
    %54 = vset.pattern.permute.xlu0 0
    %55 = vperm.xlu0 %54, %v46
    %v56 = vpop.permute.xlu0 %55
    %v58 = vmul.f32 %v43, %v51
    %v59 = vmul.f32 %v44, %v56
    %vm60 = vcmask 261120
    %v61 = vsel %vm60, %v58, 0.0
    %v62 = vrot.slane %v61, 4
    %v63 = vadd.f32 %v61, %v62
    %v64 = vrot.slane %v63, 2
    %v65 = vadd.f32 %v63, %v64
    %v66 = vrot.slane %v65, 1
    %v67 = vadd.f32 %v65, %v66
    %v68 = vsel %vm60, %v59, 0.0
    %v69 = vrot.slane %v68, 4
    %v70 = vadd.f32 %v68, %v69
    %v71 = vrot.slane %v70, 2
    %v72 = vadd.f32 %v70, %v71
    %v73 = vrot.slane %v72, 1
    %v74 = vadd.f32 %v72, %v73
    %vm77 = vcmask 1041409
    %v78 = vsel %vm77, %v74, %v67
    %v80 = vadd.f32 %v47, %v78
    %vm81 = vcmask 254976
    %82 = vst.msk [vmem:[#allocation2] sm:$0x3] %vm81, %v80
    %v83 = vld [vmem:[#allocation3] sm:$0x3]
    %vm84 = vcmask 7168
    %v85 = vsel %vm84, %v45, 0.0
    %v86 = vrot.slane %v85, 4
    %v87 = vadd.f32 %v85, %v86
    %v88 = vrot.slane %v87, 2
    %v89 = vadd.f32 %v87, %v88
    %v90 = vrot.slane %v89, 1
    %v91 = vadd.f32 %v89, %v90
    %v92 = vsel %vm84, %v46, 0.0
    %v93 = vrot.slane %v92, 4
    %v94 = vadd.f32 %v92, %v93
    %v95 = vrot.slane %v94, 2
    %v96 = vadd.f32 %v94, %v95
    %v97 = vrot.slane %v96, 1
    %v98 = vadd.f32 %v96, %v97
    %v101 = vsel %vm77, %v98, %v91
    %v103 = vadd.f32 %v83, %v101
    %vm104 = vcmask 1024
    %105 = vst.msk [vmem:[#allocation3] sm:$0x3] %vm104, %v103
    // Predicated region
    $region26: #{tpu_custom_call.1} parent=1 // pred_check
      %p106 = pneg %p33
    $region27: #{tpu_custom_call.1} parent=1 // pred_check_branch
      %108 = sbr.rel (%p106) target = $region29
    $region28: #{tpu_custom_call.1} parent=1 // pred_region
      %v109 = vld [vmem:[#allocation3] sm:$0x3]
      %v110 = vmax.f32 %v109, 1.0
      %v111 = vld [vmem:[#allocation2] sm:$0x3]
      %v112 = vrcp.pop %v110
      %114 = vset.pattern.permute.xlu0 0
      %115 = vperm.xlu0 %114, %v112
      %v116 = vpop.permute.xlu0 %115
      %v118 = vmul.f32 %v111, %v116
      %v119 = vpack.c.bf16 %v118, %v118
      %v120 = vld [vmem:[#allocation4] sm:$0xff]
      %v121 = vld [vmem:[#allocation4 + $0x8] sm:$0xff]
      %v122 = vld [vmem:[#allocation4 + $0x10] sm:$0xff]
      %v123 = vld [vmem:[#allocation4 + $0x18] sm:$0xff]
      %v124 = vld [vmem:[#allocation4 + $0x20] sm:$0xff]
      %v125 = vld [vmem:[#allocation4 + $0x28] sm:$0xff]
      %v126 = vld [vmem:[#allocation4 + $0x30] sm:$0xff]
      %v127 = vld [vmem:[#allocation4 + $0x38] sm:$0xff]
      %v128 = vld [vmem:[#allocation4 + $0x40] sm:$0xff]
      %v129 = vld [vmem:[#allocation4 + $0x48] sm:$0xff]
      %v130 = vld [vmem:[#allocation4 + $0x50] sm:$0xff]
      %v131 = vld [vmem:[#allocation4 + $0x58] sm:$0xff]
      %v132 = vld [vmem:[#allocation4 + $0x60] sm:$0xff]
      %v133 = vld [vmem:[#allocation4 + $0x68] sm:$0xff]
      %v134 = vld [vmem:[#allocation4 + $0x70] sm:$0xff]
      %v135 = vld [vmem:[#allocation4 + $0x78] sm:$0xff]
      %v136 = vld [vmem:[#allocation4 + $0x80] sm:$0xff]
      %v137 = vld [vmem:[#allocation4 + $0x88] sm:$0xff]
      %v138 = vld [vmem:[#allocation4 + $0x90] sm:$0xff]
      %v139 = vld [vmem:[#allocation4 + $0x98] sm:$0xff]
      %v140 = vld [vmem:[%s3] sm:$0xff]
      %v141 = vld [vmem:[%s3 + $0x8] sm:$0x3]
      %v144 = vlaneseq
      %v145 = vshrl.u32 %v144, 7
      %v146 = vsub.s32 0, %v145
      %v147 = vrot.slane %v140, %v146
      %v148 = vlaneseq
      %v149 = vshrl.u32 %v148, 7
      %v150 = vsub.s32 1, %v149
      %v151 = vrot.slane %v140, %v150
      %v152 = vlaneseq
      %v153 = vshrl.u32 %v152, 7
      %v154 = vsub.s32 2, %v153
      %v155 = vrot.slane %v140, %v154
      %v156 = vlaneseq
      %v157 = vshrl.u32 %v156, 7
      %v158 = vsub.s32 3, %v157
      %v159 = vrot.slane %v140, %v158
      %v160 = vlaneseq
      %v161 = vshrl.u32 %v160, 7
      %v162 = vsub.s32 4, %v161
      %v163 = vrot.slane %v140, %v162
      %v164 = vlaneseq
      %v165 = vshrl.u32 %v164, 7
      %v166 = vsub.s32 5, %v165
      %v167 = vrot.slane %v140, %v166
      %v168 = vlaneseq
      %v169 = vshrl.u32 %v168, 7
      %v170 = vsub.s32 6, %v169
      %v171 = vrot.slane %v140, %v170
      %v172 = vlaneseq
      %v173 = vshrl.u32 %v172, 7
      %v174 = vsub.s32 7, %v173
      %v175 = vrot.slane %v140, %v174
      %v176 = vlaneseq
      %v177 = vshrl.u32 %v176, 7
      %v178 = vsub.s32 0, %v177
      %v179 = vrot.slane %v141, %v178
      %v180 = vlaneseq
      %v181 = vshrl.u32 %v180, 7
      %v182 = vsub.s32 1, %v181
      %v183 = vrot.slane %v141, %v182
      %v214 = vunpack.c.l.b16 %v120
      %v215 = vunpack.c.h.b16 %v120
      %v216 = vunpack.c.l.b16 %v121
      %v217 = vunpack.c.h.b16 %v121
      %v218 = vunpack.c.l.b16 %v122
      %v219 = vunpack.c.h.b16 %v122
      %v220 = vunpack.c.l.b16 %v123
      %v221 = vunpack.c.h.b16 %v123
      %v222 = vunpack.c.l.b16 %v124
      %v223 = vunpack.c.h.b16 %v124
      %v224 = vunpack.c.l.b16 %v125
      %v225 = vunpack.c.h.b16 %v125
      %v226 = vunpack.c.l.b16 %v126
      %v227 = vunpack.c.h.b16 %v126
      %v228 = vunpack.c.l.b16 %v127
      %v229 = vunpack.c.h.b16 %v127
      %v230 = vunpack.c.l.b16 %v128
      %v231 = vunpack.c.h.b16 %v128
      %v232 = vunpack.c.l.b16 %v129
      %v233 = vunpack.c.h.b16 %v129
      %v234 = vunpack.c.l.b16 %v130
      %v235 = vunpack.c.h.b16 %v130
      %v236 = vunpack.c.l.b16 %v131
      %v237 = vunpack.c.h.b16 %v131
      %v238 = vunpack.c.l.b16 %v132
      %v239 = vunpack.c.h.b16 %v132
      %v240 = vunpack.c.l.b16 %v133
      %v241 = vunpack.c.h.b16 %v133
      %v242 = vunpack.c.l.b16 %v134
      %v243 = vunpack.c.h.b16 %v134
      %v244 = vunpack.c.l.b16 %v135
      %v245 = vunpack.c.h.b16 %v135
      %v246 = vunpack.c.l.b16 %v136
      %v247 = vunpack.c.h.b16 %v136
      %v248 = vunpack.c.l.b16 %v137
      %v249 = vunpack.c.h.b16 %v137
      %v250 = vunpack.c.l.b16 %v138
      %v251 = vunpack.c.h.b16 %v138
      %v252 = vunpack.c.l.b16 %v139
      %v253 = vunpack.c.h.b16 %v139
      %v254 = vpack.c.b16 %v224, %v214
      %v255 = vpack.c.b16 %v225, %v215
      %v256 = vpack.c.b16 %v226, %v216
      %v257 = vpack.c.b16 %v227, %v217
      %v258 = vpack.c.b16 %v228, %v218
      %v259 = vpack.c.b16 %v229, %v219
      %v260 = vpack.c.b16 %v230, %v220
      %v261 = vpack.c.b16 %v231, %v221
      %v262 = vpack.c.b16 %v232, %v222
      %v263 = vpack.c.b16 %v233, %v223
      %v264 = vpack.c.b16 %v244, %v234
      %v265 = vpack.c.b16 %v245, %v235
      %v266 = vpack.c.b16 %v246, %v236
      %v267 = vpack.c.b16 %v247, %v237
      %v268 = vpack.c.b16 %v248, %v238
      %v269 = vpack.c.b16 %v249, %v239
      %v270 = vpack.c.b16 %v250, %v240
      %v271 = vpack.c.b16 %v251, %v241
      %v272 = vpack.c.b16 %v252, %v242
      %v273 = vpack.c.b16 %v253, %v243
      %v295 = vsel %vm60, %v119, 0
      %297 = vmatprep.subr.bf16.mxu0 %v255
      %298 = vmatpush1.bf16.msra.mxu0 %v254
      %299 = vmatprep.subr.bf16.mxu0 %v265
      %300 = vmatpush1.bf16.msra.mxu0 %v264
      %301 = vmatprep.subr.bf16.mxu0 0
      %302 = vmatpush1.bf16.msra.mxu0 0
      %303 = vmatprep.subr.bf16.mxu0 0
      %304 = vmatpush1.bf16.msra.mxu0 0
      %305 = vmatprep.subr.bf16.mxu0 0
      %306 = vmatpush1.bf16.msra.mxu0 0
      %307 = vmatprep.subr.bf16.mxu0 0
      %308 = vmatpush1.bf16.msra.mxu0 0
      %309 = vmatprep.subr.bf16.mxu0 0
      %310 = vmatpush1.bf16.msra.mxu0 0
      %311 = vmatprep.subr.bf16.mxu0 0
      %312 = vmatpush1.bf16.msra.mxu0 0
      %313 = vmatprep.subr.bf16.mxu0 0
      %314 = vmatpush1.bf16.msra.mxu0 0
      %315 = vmatprep.subr.bf16.mxu0 0
      %316 = vmatpush1.bf16.msra.mxu0 0
      %317 = vmatprep.subr.bf16.mxu0 0
      %318 = vmatpush1.bf16.msra.mxu0 0
      %319 = vmatprep.subr.bf16.mxu0 0
      %320 = vmatpush1.bf16.msra.mxu0 0
      %321 = vmatprep.subr.bf16.mxu0 0
      %322 = vmatpush1.bf16.msra.mxu0 0
      %323 = vmatprep.subr.bf16.mxu0 0
      %324 = vmatpush1.bf16.msra.mxu0 0
      %325 = vmatprep.subr.bf16.mxu0 0
      %326 = vmatpush1.bf16.msra.mxu0 0
      %327 = vmatprep.subr.bf16.mxu0 0
      %328 = vmatpush1.bf16.msra.mxu0 0
      %329 = vmatprep.mubr.bf16.mxu0 0
      %330 = vmatmul.mubr.bf16.gmra.mrb[0].mxu0 %v295
      %v331 = vpop.f32.mrb[0].mxu0
      %v332 = vadd.f32 %v147, %v331
      %v333 = vpop.f32.mrb[0].mxu0
      %v334 = vadd.f32 %v151, %v333
      %v335 = vpop.f32.mrb[0].mxu0
      %v336 = vpop.f32.mrb[0].mxu0
      %337 = vdwg.mxu0
      %338 = vmatprep.subr.bf16.mxu0 %v257
      %339 = vmatpush1.bf16.msra.mxu0 %v256
      %340 = vmatprep.subr.bf16.mxu0 %v267
      %341 = vmatpush1.bf16.msra.mxu0 %v266
      %342 = vmatprep.subr.bf16.mxu0 0
      %343 = vmatpush1.bf16.msra.mxu0 0
      %344 = vmatprep.subr.bf16.mxu0 0
      %345 = vmatpush1.bf16.msra.mxu0 0
      %346 = vmatprep.subr.bf16.mxu0 0
      %347 = vmatpush1.bf16.msra.mxu0 0
      %348 = vmatprep.subr.bf16.mxu0 0
      %349 = vmatpush1.bf16.msra.mxu0 0
      %350 = vmatprep.subr.bf16.mxu0 0
      %351 = vmatpush1.bf16.msra.mxu0 0
      %352 = vmatprep.subr.bf16.mxu0 0
      %353 = vmatpush1.bf16.msra.mxu0 0
      %354 = vmatprep.subr.bf16.mxu0 0
      %355 = vmatpush1.bf16.msra.mxu0 0
      %356 = vmatprep.subr.bf16.mxu0 0
      %357 = vmatpush1.bf16.msra.mxu0 0
      %358 = vmatprep.subr.bf16.mxu0 0
      %359 = vmatpush1.bf16.msra.mxu0 0
      %360 = vmatprep.subr.bf16.mxu0 0
      %361 = vmatpush1.bf16.msra.mxu0 0
      %362 = vmatprep.subr.bf16.mxu0 0
      %363 = vmatpush1.bf16.msra.mxu0 0
      %364 = vmatprep.subr.bf16.mxu0 0
      %365 = vmatpush1.bf16.msra.mxu0 0
      %366 = vmatprep.subr.bf16.mxu0 0
      %367 = vmatpush1.bf16.msra.mxu0 0
      %368 = vmatprep.subr.bf16.mxu0 0
      %369 = vmatpush1.bf16.msra.mxu0 0
      %370 = vmatprep.mubr.bf16.mxu0 0
      %371 = vmatmul.mubr.bf16.gmra.mrb[0].mxu0 %v295
      %v372 = vpop.f32.mrb[0].mxu0
      %v373 = vadd.f32 %v155, %v372
      %v374 = vpop.f32.mrb[0].mxu0
      %v375 = vadd.f32 %v159, %v374
      %v376 = vpop.f32.mrb[0].mxu0
      %v377 = vpop.f32.mrb[0].mxu0
      %378 = vdwg.mxu0
      %379 = vmatprep.subr.bf16.mxu0 %v259
      %380 = vmatpush1.bf16.msra.mxu0 %v258
      %381 = vmatprep.subr.bf16.mxu0 %v269
      %382 = vmatpush1.bf16.msra.mxu0 %v268
      %383 = vmatprep.subr.bf16.mxu0 0
      %384 = vmatpush1.bf16.msra.mxu0 0
      %385 = vmatprep.subr.bf16.mxu0 0
      %386 = vmatpush1.bf16.msra.mxu0 0
      %387 = vmatprep.subr.bf16.mxu0 0
      %388 = vmatpush1.bf16.msra.mxu0 0
      %389 = vmatprep.subr.bf16.mxu0 0
      %390 = vmatpush1.bf16.msra.mxu0 0
      %391 = vmatprep.subr.bf16.mxu0 0
      %392 = vmatpush1.bf16.msra.mxu0 0
      %393 = vmatprep.subr.bf16.mxu0 0
      %394 = vmatpush1.bf16.msra.mxu0 0
      %395 = vmatprep.subr.bf16.mxu0 0
      %396 = vmatpush1.bf16.msra.mxu0 0
      %397 = vmatprep.subr.bf16.mxu0 0
      %398 = vmatpush1.bf16.msra.mxu0 0
      %399 = vmatprep.subr.bf16.mxu0 0
      %400 = vmatpush1.bf16.msra.mxu0 0
      %401 = vmatprep.subr.bf16.mxu0 0
      %402 = vmatpush1.bf16.msra.mxu0 0
      %403 = vmatprep.subr.bf16.mxu0 0
      %404 = vmatpush1.bf16.msra.mxu0 0
      %405 = vmatprep.subr.bf16.mxu0 0
      %406 = vmatpush1.bf16.msra.mxu0 0
      %407 = vmatprep.subr.bf16.mxu0 0
      %408 = vmatpush1.bf16.msra.mxu0 0
      %409 = vmatprep.subr.bf16.mxu0 0
      %410 = vmatpush1.bf16.msra.mxu0 0
      %411 = vmatprep.mubr.bf16.mxu0 0
      %412 = vmatmul.mubr.bf16.gmra.mrb[0].mxu0 %v295
      %v413 = vpop.f32.mrb[0].mxu0
      %v414 = vadd.f32 %v163, %v413
      %v415 = vpop.f32.mrb[0].mxu0
      %v416 = vadd.f32 %v167, %v415
      %v417 = vpop.f32.mrb[0].mxu0
      %v418 = vpop.f32.mrb[0].mxu0
      %419 = vdwg.mxu0
      %420 = vmatprep.subr.bf16.mxu0 %v261
      %421 = vmatpush1.bf16.msra.mxu0 %v260
      %422 = vmatprep.subr.bf16.mxu0 %v271
      %423 = vmatpush1.bf16.msra.mxu0 %v270
      %424 = vmatprep.subr.bf16.mxu0 0
      %425 = vmatpush1.bf16.msra.mxu0 0
      %426 = vmatprep.subr.bf16.mxu0 0
      %427 = vmatpush1.bf16.msra.mxu0 0
      %428 = vmatprep.subr.bf16.mxu0 0
      %429 = vmatpush1.bf16.msra.mxu0 0
      %430 = vmatprep.subr.bf16.mxu0 0
      %431 = vmatpush1.bf16.msra.mxu0 0
      %432 = vmatprep.subr.bf16.mxu0 0
      %433 = vmatpush1.bf16.msra.mxu0 0
      %434 = vmatprep.subr.bf16.mxu0 0
      %435 = vmatpush1.bf16.msra.mxu0 0
      %436 = vmatprep.subr.bf16.mxu0 0
      %437 = vmatpush1.bf16.msra.mxu0 0
      %438 = vmatprep.subr.bf16.mxu0 0
      %439 = vmatpush1.bf16.msra.mxu0 0
      %440 = vmatprep.subr.bf16.mxu0 0
      %441 = vmatpush1.bf16.msra.mxu0 0
      %442 = vmatprep.subr.bf16.mxu0 0
      %443 = vmatpush1.bf16.msra.mxu0 0
      %444 = vmatprep.subr.bf16.mxu0 0
      %445 = vmatpush1.bf16.msra.mxu0 0
      %446 = vmatprep.subr.bf16.mxu0 0
      %447 = vmatpush1.bf16.msra.mxu0 0
      %448 = vmatprep.subr.bf16.mxu0 0
      %449 = vmatpush1.bf16.msra.mxu0 0
      %450 = vmatprep.subr.bf16.mxu0 0
      %451 = vmatpush1.bf16.msra.mxu0 0
      %452 = vmatprep.mubr.bf16.mxu0 0
      %453 = vmatmul.mubr.bf16.gmra.mrb[0].mxu0 %v295
      %v454 = vpop.f32.mrb[0].mxu0
      %v455 = vadd.f32 %v171, %v454
      %v456 = vpop.f32.mrb[0].mxu0
      %v457 = vadd.f32 %v175, %v456
      %v458 = vpop.f32.mrb[0].mxu0
      %v459 = vpop.f32.mrb[0].mxu0
      %460 = vdwg.mxu0
      %461 = vmatprep.subr.bf16.mxu0 %v263
      %462 = vmatpush1.bf16.msra.mxu0 %v262
      %463 = vmatprep.subr.bf16.mxu0 %v273
      %464 = vmatpush1.bf16.msra.mxu0 %v272
      %465 = vmatprep.subr.bf16.mxu0 0
      %466 = vmatpush1.bf16.msra.mxu0 0
      %467 = vmatprep.subr.bf16.mxu0 0
      %468 = vmatpush1.bf16.msra.mxu0 0
      %469 = vmatprep.subr.bf16.mxu0 0
      %470 = vmatpush1.bf16.msra.mxu0 0
      %471 = vmatprep.subr.bf16.mxu0 0
      %472 = vmatpush1.bf16.msra.mxu0 0
      %473 = vmatprep.subr.bf16.mxu0 0
      %474 = vmatpush1.bf16.msra.mxu0 0
      %475 = vmatprep.subr.bf16.mxu0 0
      %476 = vmatpush1.bf16.msra.mxu0 0
      %477 = vmatprep.subr.bf16.mxu0 0
      %478 = vmatpush1.bf16.msra.mxu0 0
      %479 = vmatprep.subr.bf16.mxu0 0
      %480 = vmatpush1.bf16.msra.mxu0 0
      %481 = vmatprep.subr.bf16.mxu0 0
      %482 = vmatpush1.bf16.msra.mxu0 0
      %483 = vmatprep.subr.bf16.mxu0 0
      %484 = vmatpush1.bf16.msra.mxu0 0
      %485 = vmatprep.subr.bf16.mxu0 0
      %486 = vmatpush1.bf16.msra.mxu0 0
      %487 = vmatprep.subr.bf16.mxu0 0
      %488 = vmatpush1.bf16.msra.mxu0 0
      %489 = vmatprep.subr.bf16.mxu0 0
      %490 = vmatpush1.bf16.msra.mxu0 0
      %491 = vmatprep.subr.bf16.mxu0 0
      %492 = vmatpush1.bf16.msra.mxu0 0
      %493 = vmatprep.mubr.bf16.mxu0 0
      %494 = vmatmul.mubr.bf16.gmra.mrb[0].mxu0 %v295
      %v495 = vpop.f32.mrb[0].mxu0
      %v496 = vadd.f32 %v179, %v495
      %v497 = vpop.f32.mrb[0].mxu0
      %v498 = vadd.f32 %v183, %v497
      %v499 = vpop.f32.mrb[0].mxu0
      %v500 = vpop.f32.mrb[0].mxu0
      %501 = vdwg.mxu0
      %v512 = vcombine.low %v332, %v334
      %v513 = vcombine.low %v373, %v375
      %v515 = vunpack.c.l.s4 1983009808
      %v516 = vunpack.c.0.s8 %v515
      %v517 = vlaneseq
      %v518 = vshrl.u32 %v517, 7
      %v519 = vsub.s32 %v516, %v518
      %v520 = vrot.slane %v512, %v519
      %v522 = vunpack.c.l.s4 1983009808
      %v523 = vunpack.c.0.s8 %v522
      %v524 = vlaneseq
      %v525 = vshrl.u32 %v524, 7
      %v526 = vsub.s32 %v523, %v525
      %v527 = vrot.slane %v513, %v526
      %v528 = vcombine.low %v520, %v527
      %v529 = vcombine.low %v414, %v416
      %v530 = vcombine.low %v455, %v457
      %v532 = vunpack.c.l.s4 1983009808
      %v533 = vunpack.c.0.s8 %v532
      %v534 = vlaneseq
      %v535 = vshrl.u32 %v534, 7
      %v536 = vsub.s32 %v533, %v535
      %v537 = vrot.slane %v529, %v536
      %v539 = vunpack.c.l.s4 1983009808
      %v540 = vunpack.c.0.s8 %v539
      %v541 = vlaneseq
      %v542 = vshrl.u32 %v541, 7
      %v543 = vsub.s32 %v540, %v542
      %v544 = vrot.slane %v530, %v543
      %v545 = vcombine.low %v537, %v544
      %v546 = vcombine.low %v496, %v498
      %v548 = vunpack.c.l.s4 1983009808
      %v549 = vunpack.c.0.s8 %v548
      %v550 = vlaneseq
      %v551 = vshrl.u32 %v550, 7
      %v552 = vsub.s32 %v549, %v551
      %v553 = vrot.slane %v546, %v552
      %557 = vst [vmem:[#allocation7] sm:$0xff] %v528
      %558 = vst [vmem:[#allocation7 + $0x8] sm:$0xff] %v545
      %559 = vst [vmem:[#allocation7 + $0x10] sm:$0xf] %v553
    $region29: #{tpu_custom_call.1} parent=1 // pred_fallthru
      _
    // Predicated region
    $region30: #{tpu_custom_call.1} parent=1 // pred_check
      _
    $region31: #{tpu_custom_call.1} parent=1 // pred_check_branch
      %561 = sbr.rel (0) target = $region33
    $region32: #{tpu_custom_call.1} parent=1 // pred_region
      %s563 = ssub.s32 320, 320
      %564 = vsyncadd [#allocation6], %s563
      %s566 = sshll.u32 [#allocation7], 4
      %s567 = int_to_ptr.vmem [resolvable:$true] %s566
      %569 = dma.vmem_to_hbm [thread:$0]  %s567, 320, %s4, [#allocation6]
    $region33: #{tpu_custom_call.1} parent=1 // pred_fallthru
      _
    // Predicated region
    $region34: #{tpu_custom_call.1} parent=1 // pred_check
      _
    $region35: #{tpu_custom_call.1} parent=1 // pred_check_branch
      %571 = sbr.rel (0) target = $region37
    $region36: #{tpu_custom_call.1} parent=1 // pred_region
      %572 = dma.done [#allocation6], 320
    $region37: #{tpu_custom_call.1} parent=1 // pred_fallthru
      _
    %573 = vsyncpa [#allocation5], 1
    %574 = vsyncpa [#allocation6], 1

</llo_original>
